<compile_context>
chip_gen: v5e
topology: v5e:2x2
jax: 0.10.0
libtpu: 0.0.40
codegen_flags: <defaults>
</compile_context>

<pallas_src>
import math
import functools

import jax
import jax.numpy as jnp
from jax import lax
from jax.experimental import pallas as pl
from jax.experimental.pallas import tpu as pltpu


def _self_attention_kernel(x_ref, wq_ref, wk_ref, wv_ref, wo_ref, o_ref, carry_ref,
                           *, num_heads, block_b, seq, dim):
    """One layer-step of the fused stack for `block_b` batch elements.

    x_ref     : (block_b, N, D) VMEM  kernel input (read only at layer 0)
    w*_ref    : (D, D)          VMEM  this layer's pre-transposed weights (D_in, D_out)
    o_ref     : (block_b, N, D) VMEM  HBM output block (written only at the last layer)
    carry_ref : (block_b, N, D) f32 VMEM scratch — residual stream carried across layers
    """
    layer = pl.program_id(1)
    n_layers = pl.num_programs(1)

    @pl.when(layer == 0)
    def _():
        carry_ref[...] = x_ref[...].astype(jnp.float32)

    rows = block_b * seq
    dh = dim // num_heads
    mm_dtype = wq_ref.dtype                 # bf16 weights -> bf16 MXU fast path

    # (block_b, N, D) -> (rows, D); layout-free when N % sublane == 0 (wrapper enforces).
    x2 = carry_ref[...].reshape(rows, dim).astype(mm_dtype)

    # y = x @ W with W stored (D_in, D_out): contract dim 1 of x with dim 0 of W.
    dn = (((1,), (0,)), ((), ()))
    q = lax.dot_general(x2, wq_ref[...], dn, preferred_element_type=jnp.float32)
    k = lax.dot_general(x2, wk_ref[...], dn, preferred_element_type=jnp.float32)  # 1/sqrt(D) folded into Wk
    v = lax.dot_general(x2, wv_ref[...], dn, preferred_element_type=jnp.float32)

    q3 = q.reshape(block_b, seq, dim)       # f32, kept for the residual
    q3m = q3.astype(mm_dtype)
    k3m = k.reshape(block_b, seq, dim).astype(mm_dtype)
    v3m = v.reshape(block_b, seq, dim).astype(mm_dtype)

    # Per-head attention batched over block_b (single batch-dim einsums); head slices
    # are lane-aligned when dh % 128 == 0. Softmax math stays f32.
    heads = []
    for h in range(num_heads):              # static, small
        c0 = h * dh
        qh = q3m[:, :, c0:c0 + dh]
        kh = k3m[:, :, c0:c0 + dh]
        vh = v3m[:, :, c0:c0 + dh]
        s = jnp.einsum('bqd,bkd->bqk', qh, kh, preferred_element_type=jnp.float32)
        s = s - jnp.max(s, axis=-1, keepdims=True)
        e = jnp.exp(s)
        p = e / jnp.sum(e, axis=-1, keepdims=True)          # exact reciprocal (accuracy)
        heads.append(jnp.einsum('bqk,bkd->bqd', p.astype(mm_dtype), vh,
                                preferred_element_type=jnp.float32))

    # Lane-dense head merge (single value); residual against the *projected* Q.
    o3 = q3 + jnp.concatenate(heads, axis=-1)

    o2 = o3.reshape(rows, dim)
    fo = lax.dot_general(o2.astype(mm_dtype), wo_ref[...], dn,
                         preferred_element_type=jnp.float32)
    o2 = o2 + jnp.maximum(fo, 0.0)          # O + ReLU(fc_o(O)); dropout = identity (eval)

    o_new = o2.reshape(block_b, seq, dim)
    carry_ref[...] = o_new                  # f32 residual stream stays resident in VMEM

    @pl.when(layer == n_layers - 1)
    def _():
        o_ref[...] = o_new.astype(o_ref.dtype)


def self_attention(x, params, *, num_heads, block_b=None, weight_dtype=None):
    """SelfAttention.forward(Q, mask=None): whole layer stack in one pallas_call.

    x      : (B, N, D)
    params : list of L tuples (Wq, Wk, Wv, Wo), each (D, D) in PyTorch (out, in) convention.
    weight_dtype : dtype for the stacked weights / MXU inputs (default: x.dtype).
                   Pass jnp.bfloat16 in production for the bf16 MXU path + half the
                   weight DMA bytes; accumulation and softmax stay f32.
    """
    B, N, D = x.shape
    L = len(params)
    assert D % num_heads == 0

    wdtype = jnp.dtype(weight_dtype) if weight_dtype is not None else x.dtype
    inv_sqrt_d = 1.0 / math.sqrt(D)

    # Stack per-layer weights pre-transposed to (D_in, D_out); fold the softmax scale
    # into Wk (not Wq — the residual needs the unscaled projected Q).
    wq = jnp.stack([p[0].T for p in params]).astype(wdtype)
    wk = (jnp.stack([p[1].T for p in params]) * inv_sqrt_d).astype(wdtype)
    wv = jnp.stack([p[2].T for p in params]).astype(wdtype)
    wo = jnp.stack([p[3].T for p in params]).astype(wdtype)

    sublane = 8 if jnp.dtype(x.dtype).itemsize >= 4 else 16
    if block_b is None:
        # Fill the 256-wide MXU M dimension (v6e/v7x) but keep >=2 grid steps on the
        # parallel batch axis when B allows (megacore / v7x second TC); only merge
        # batch+seq rows when the (block_b,N,D)<->(rows,D) reshape is layout-free.
        target_rows = 256
        block_b = max(1, min(B, target_rows // max(N, 1))) if N % sublane == 0 else 1
        while block_b > 1 and (B % block_b != 0 or B // block_b < 2):
            block_b -= 1
    assert B % block_b == 0

    # Generation-aware VMEM budget derived from actual tile sizes, clamped under the
    # physical capacity (64 MiB on v7x, 128 MiB on v5e/v6e).
    xbytes = jnp.dtype(x.dtype).itemsize
    wbytes = jnp.dtype(wdtype).itemsize
    rows = block_b * N
    weight_bytes = 2 * 4 * D * D * wbytes                       # 4 weights, double-buffered
    act_bytes = 4 * block_b * N * D * xbytes + block_b * N * D * 4   # in/out blocks + f32 carry
    tmp_bytes = 10 * rows * D * 4 + 3 * block_b * N * N * 4     # q/k/v/o temps + per-head scores
    need = int(1.5 * (weight_bytes + act_bytes + tmp_bytes))
    try:
        vmem_cap = int(pltpu.get_tpu_info().vmem_capacity_bytes)
    except Exception:
        vmem_cap = 64 * 1024 * 1024                             # conservative (v7x)
    vmem_limit = max(32 * 1024 * 1024, min(need, vmem_cap * 7 // 8))

    kernel = functools.partial(_self_attention_kernel, num_heads=num_heads,
                               block_b=block_b, seq=N, dim=D)
    # Weight spec: squeeze the layer dim; index_map depends on the layer grid axis so
    # the pipeline double-buffers (prefetches) the next layer's weights.
    w_spec = pl.BlockSpec((None, D, D), lambda i, l: (l, 0, 0))
    # Activation spec: block index constant across the layer axis => fetched once per
    # batch block; the output block is written back to HBM once (last layer).
    act_spec = pl.BlockSpec((block_b, N, D), lambda i, l: (i, 0, 0))

    return pl.pallas_call(
        kernel,
        out_shape=jax.ShapeDtypeStruct((B, N, D), x.dtype),
        grid_spec=pltpu.PrefetchScalarGridSpec(
            num_scalar_prefetch=0,
            grid=(B // block_b, L),
            in_specs=[act_spec, w_spec, w_spec, w_spec, w_spec],
            out_specs=act_spec,
            scratch_shapes=[pltpu.VMEM((block_b, N, D), jnp.float32)],
        ),
        compiler_params=pltpu.CompilerParams(
            dimension_semantics=("parallel", "arbitrary"),
            vmem_limit_bytes=vmem_limit,
        ),
    )(x, wq, wk, wv, wo)


# ------------------------- pure-JAX reference -------------------------
def _reference_layer(x, wq, wk, wv, wo, num_heads):
    B, N, D = x.shape
    dh = D // num_heads
    q = x @ wq.T
    k = x @ wk.T
    v = x @ wv.T
    qh = q.reshape(B, N, num_heads, dh).transpose(0, 2, 1, 3)
    kh = k.reshape(B, N, num_heads, dh).transpose(0, 2, 1, 3)
    vh = v.reshape(B, N, num_heads, dh).transpose(0, 2, 1, 3)
    a = jnp.einsum("bhqd,bhkd->bhqk", qh, kh) / math.sqrt(D)
    a = jax.nn.softmax(a, axis=-1)
    oh = jnp.einsum("bhqk,bhkd->bhqd", a, vh)
    o = oh.transpose(0, 2, 1, 3).reshape(B, N, D)
    o = q + o
    o = o + jnp.maximum(o @ wo.T, 0.0)
    return o


def _reference(x, params, num_heads):
    for (wq, wk, wv, wo) in params:
        x = _reference_layer(x, wq, wk, wv, wo, num_heads)
    return x


if __name__ == "__main__":
    def _make_case(key, B, N, D, L):
        key, kx = jax.random.split(key)
        x = jax.random.normal(kx, (B, N, D), dtype=jnp.float32)
        params = []
        for _ in range(L):
            ws = []
            for _ in range(4):  # Wq, Wk, Wv, Wo  (nn.Linear(dim, dim, bias=False))
                key, kw = jax.random.split(key)
                ws.append(jax.random.normal(kw, (D, D), dtype=jnp.float32)
                          * (1.0 / math.sqrt(D)))
            params.append(tuple(ws))
        return key, x, params

    key = jax.random.PRNGKey(0)
    n_heads, n_layers = 4, 2
    ATOL, RTOL = 5e-3, 5e-3   # exact softmax reciprocal; semantic bugs would be O(0.1)+

    # Case 1: B=2, N=8, D=32 -> block_b=1 (keeps a 2-wide parallel batch axis).
    key, x1, p1 = _make_case(key, B=2, N=8, D=32, L=n_layers)
    out1 = jax.block_until_ready(self_attention(x1, p1, num_heads=n_heads))
    ref1 = _reference(x1, p1, n_heads)
    assert out1.shape == x1.shape
    assert jnp.allclose(out1, ref1, atol=ATOL, rtol=RTOL), (
        float(jnp.max(jnp.abs(out1 - ref1))))

    # Case 2: B=4, N=8, D=32 -> block_b=2 (exercises the multi-batch-per-step batched
    # attention path while keeping 2 parallel grid steps).
    key, x2, p2 = _make_case(key, B=4, N=8, D=32, L=n_layers)
    out2 = jax.block_until_ready(self_attention(x2, p2, num_heads=n_heads))
    ref2 = _reference(x2, p2, n_heads)
    assert out2.shape == x2.shape
    assert jnp.allclose(out2, ref2, atol=ATOL, rtol=RTOL), (
        float(jnp.max(jnp.abs(out2 - ref2))))

    print("KERNEL_OK")
</pallas_src>

<mosaic_0001>
module attributes {stable_mosaic.version = 11 : i64} {
  func.func @_self_attention_kernel(%arg0: i32, %arg1: i32, %arg2: memref<1x8x32xf32, #tpu.memory_space<vmem>>, %arg3: memref<1x32x32xf32, #tpu.memory_space<vmem>>, %arg4: memref<1x32x32xf32, #tpu.memory_space<vmem>>, %arg5: memref<1x32x32xf32, #tpu.memory_space<vmem>>, %arg6: memref<1x32x32xf32, #tpu.memory_space<vmem>>, %arg7: memref<1x8x32xf32, #tpu.memory_space<vmem>>, %arg8: memref<1x8x32xf32, #tpu.memory_space<vmem>>) attributes {dimension_semantics = [#tpu.dimension_semantics<parallel>, #tpu.dimension_semantics<arbitrary>], iteration_bounds = array<i64: 2, 2>, scalar_prefetch = 0 : i64, scratch_operands = 1 : i64, tpu.core_type = #tpu.core_type<tc>, window_params = [{transform_indices = @transform_0, window_bounds = array<i64: 1, 8, 32>}, {transform_indices = @transform_1, window_bounds = array<i64: 1, 32, 32>}, {transform_indices = @transform_2, window_bounds = array<i64: 1, 32, 32>}, {transform_indices = @transform_3, window_bounds = array<i64: 1, 32, 32>}, {transform_indices = @transform_4, window_bounds = array<i64: 1, 32, 32>}, {transform_indices = @transform_5, window_bounds = array<i64: 1, 8, 32>}]} {
    %c0_i32 = arith.constant 0 : i32
    %0 = arith.cmpi eq, %arg1, %c0_i32 : i32
    %1 = arith.extui %0 : i1 to i32
    %c0_i32_0 = arith.constant 0 : i32
    %2 = arith.cmpi ne, %1, %c0_i32_0 : i32
    scf.if %2 {
      %c0_39 = arith.constant 0 : index
      %c0_40 = arith.constant 0 : index
      %c0_41 = arith.constant 0 : index
      %87 = vector.load %arg2[%c0_39, %c0_40, %c0_41] : memref<1x8x32xf32, #tpu.memory_space<vmem>>, vector<1x8x32xf32>
      %c0_42 = arith.constant 0 : index
      %c0_43 = arith.constant 0 : index
      %c0_44 = arith.constant 0 : index
      %88 = vector.load %arg8[%c0_42, %c0_43, %c0_44] : memref<1x8x32xf32, #tpu.memory_space<vmem>>, vector<1x8x32xf32>
      tpu.vector_store %arg8[%c0_42, %c0_43, %c0_44], %87 {strides = array<i32>} : memref<1x8x32xf32, #tpu.memory_space<vmem>>, vector<1x8x32xf32>,
    } else {
    }
    %c0 = arith.constant 0 : index
    %c0_1 = arith.constant 0 : index
    %c0_2 = arith.constant 0 : index
    %3 = vector.load %arg8[%c0, %c0_1, %c0_2] : memref<1x8x32xf32, #tpu.memory_space<vmem>>, vector<1x8x32xf32>
    %4 = vector.shape_cast %3 : vector<1x8x32xf32> to vector<8x32xf32>
    %c0_3 = arith.constant 0 : index
    %c0_4 = arith.constant 0 : index
    %c0_5 = arith.constant 0 : index
    %5 = vector.load %arg3[%c0_3, %c0_4, %c0_5] : memref<1x32x32xf32, #tpu.memory_space<vmem>>, vector<1x32x32xf32>
    %6 = vector.shape_cast %5 : vector<1x32x32xf32> to vector<32x32xf32>
    %cst = arith.constant dense<0.000000e+00> : vector<8x32xf32>
    %7 = tpu.matmul %4, %6, %cst {dimension_numbers = #tpu.dot_dimension_numbers<[1], [0], [0], [1], [0, 0, 1, 1], [], []>} : vector<8x32xf32>, vector<32x32xf32>, vector<8x32xf32> -> vector<8x32xf32>
    %c0_6 = arith.constant 0 : index
    %c0_7 = arith.constant 0 : index
    %c0_8 = arith.constant 0 : index
    %8 = vector.load %arg4[%c0_6, %c0_7, %c0_8] : memref<1x32x32xf32, #tpu.memory_space<vmem>>, vector<1x32x32xf32>
    %9 = vector.shape_cast %8 : vector<1x32x32xf32> to vector<32x32xf32>
    %cst_9 = arith.constant dense<0.000000e+00> : vector<8x32xf32>
    %10 = tpu.matmul %4, %9, %cst_9 {dimension_numbers = #tpu.dot_dimension_numbers<[1], [0], [0], [1], [0, 0, 1, 1], [], []>} : vector<8x32xf32>, vector<32x32xf32>, vector<8x32xf32> -> vector<8x32xf32>
    %c0_10 = arith.constant 0 : index
    %c0_11 = arith.constant 0 : index
    %c0_12 = arith.constant 0 : index
    %11 = vector.load %arg5[%c0_10, %c0_11, %c0_12] : memref<1x32x32xf32, #tpu.memory_space<vmem>>, vector<1x32x32xf32>
    %12 = vector.shape_cast %11 : vector<1x32x32xf32> to vector<32x32xf32>
    %cst_13 = arith.constant dense<0.000000e+00> : vector<8x32xf32>
    %13 = tpu.matmul %4, %12, %cst_13 {dimension_numbers = #tpu.dot_dimension_numbers<[1], [0], [0], [1], [0, 0, 1, 1], [], []>} : vector<8x32xf32>, vector<32x32xf32>, vector<8x32xf32> -> vector<8x32xf32>
    %14 = vector.shape_cast %7 : vector<8x32xf32> to vector<1x8x32xf32>
    %15 = vector.shape_cast %10 : vector<8x32xf32> to vector<1x8x32xf32>
    %16 = vector.shape_cast %13 : vector<8x32xf32> to vector<1x8x32xf32>
    %17 = vector.extract_strided_slice %14 {offsets = [0, 0, 0], sizes = [1, 8, 8], strides = [1, 1, 1]} : vector<1x8x32xf32> to vector<1x8x8xf32>
    %18 = vector.extract_strided_slice %15 {offsets = [0, 0, 0], sizes = [1, 8, 8], strides = [1, 1, 1]} : vector<1x8x32xf32> to vector<1x8x8xf32>
    %19 = vector.extract_strided_slice %16 {offsets = [0, 0, 0], sizes = [1, 8, 8], strides = [1, 1, 1]} : vector<1x8x32xf32> to vector<1x8x8xf32>
    "tpu.trace_start"() <{level = 10 : i32, message = "bqd,bkd->bqk"}> : () -> ()
    %cst_14 = arith.constant dense<0.000000e+00> : vector<1x8x8xf32>
    %20 = tpu.matmul %17, %18, %cst_14 {dimension_numbers = #tpu.dot_dimension_numbers<[2], [2], [1], [1], [0, 0, 0, 1, 1, 1], [0], [0]>} : vector<1x8x8xf32>, vector<1x8x8xf32>, vector<1x8x8xf32> -> vector<1x8x8xf32>
    "tpu.trace_stop"() : () -> ()
    %cst_15 = arith.constant dense<0xFF800000> : vector<1x8xf32>
    %21 = vector.multi_reduction <maximumf>, %20, %cst_15 [2] : vector<1x8x8xf32> to vector<1x8xf32>
    %22 = vector.shape_cast %21 : vector<1x8xf32> to vector<1x8x1xf32>
    %23 = vector.broadcast %22 : vector<1x8x1xf32> to vector<1x8x8xf32>
    %24 = arith.subf %20, %23 : vector<1x8x8xf32>
    %25 = math.exp %24 : vector<1x8x8xf32>
    %cst_16 = arith.constant dense<0.000000e+00> : vector<1x8xf32>
    %26 = vector.multi_reduction <add>, %25, %cst_16 [2] : vector<1x8x8xf32> to vector<1x8xf32>
    %27 = vector.shape_cast %26 : vector<1x8xf32> to vector<1x8x1xf32>
    %28 = vector.broadcast %27 : vector<1x8x1xf32> to vector<1x8x8xf32>
    %29 = arith.divf %25, %28 : vector<1x8x8xf32>
    "tpu.trace_start"() <{level = 10 : i32, message = "bqk,bkd->bqd"}> : () -> ()
    %cst_17 = arith.constant dense<0.000000e+00> : vector<1x8x8xf32>
    %30 = tpu.matmul %29, %19, %cst_17 {dimension_numbers = #tpu.dot_dimension_numbers<[2], [1], [1], [2], [0, 0, 0, 1, 1, 2], [0], [0]>} : vector<1x8x8xf32>, vector<1x8x8xf32>, vector<1x8x8xf32> -> vector<1x8x8xf32>
    "tpu.trace_stop"() : () -> ()
    %31 = vector.extract_strided_slice %14 {offsets = [0, 0, 8], sizes = [1, 8, 8], strides = [1, 1, 1]} : vector<1x8x32xf32> to vector<1x8x8xf32>
    %32 = vector.extract_strided_slice %15 {offsets = [0, 0, 8], sizes = [1, 8, 8], strides = [1, 1, 1]} : vector<1x8x32xf32> to vector<1x8x8xf32>
    %33 = vector.extract_strided_slice %16 {offsets = [0, 0, 8], sizes = [1, 8, 8], strides = [1, 1, 1]} : vector<1x8x32xf32> to vector<1x8x8xf32>
    "tpu.trace_start"() <{level = 10 : i32, message = "bqd,bkd->bqk"}> : () -> ()
    %cst_18 = arith.constant dense<0.000000e+00> : vector<1x8x8xf32>
    %34 = tpu.matmul %31, %32, %cst_18 {dimension_numbers = #tpu.dot_dimension_numbers<[2], [2], [1], [1], [0, 0, 0, 1, 1, 1], [0], [0]>} : vector<1x8x8xf32>, vector<1x8x8xf32>, vector<1x8x8xf32> -> vector<1x8x8xf32>
    "tpu.trace_stop"() : () -> ()
    %cst_19 = arith.constant dense<0xFF800000> : vector<1x8xf32>
    %35 = vector.multi_reduction <maximumf>, %34, %cst_19 [2] : vector<1x8x8xf32> to vector<1x8xf32>
    %36 = vector.shape_cast %35 : vector<1x8xf32> to vector<1x8x1xf32>
    %37 = vector.broadcast %36 : vector<1x8x1xf32> to vector<1x8x8xf32>
    %38 = arith.subf %34, %37 : vector<1x8x8xf32>
    %39 = math.exp %38 : vector<1x8x8xf32>
    %cst_20 = arith.constant dense<0.000000e+00> : vector<1x8xf32>
    %40 = vector.multi_reduction <add>, %39, %cst_20 [2] : vector<1x8x8xf32> to vector<1x8xf32>
    %41 = vector.shape_cast %40 : vector<1x8xf32> to vector<1x8x1xf32>
    %42 = vector.broadcast %41 : vector<1x8x1xf32> to vector<1x8x8xf32>
    %43 = arith.divf %39, %42 : vector<1x8x8xf32>
    "tpu.trace_start"() <{level = 10 : i32, message = "bqk,bkd->bqd"}> : () -> ()
    %cst_21 = arith.constant dense<0.000000e+00> : vector<1x8x8xf32>
    %44 = tpu.matmul %43, %33, %cst_21 {dimension_numbers = #tpu.dot_dimension_numbers<[2], [1], [1], [2], [0, 0, 0, 1, 1, 2], [0], [0]>} : vector<1x8x8xf32>, vector<1x8x8xf32>, vector<1x8x8xf32> -> vector<1x8x8xf32>
    "tpu.trace_stop"() : () -> ()
    %45 = vector.extract_strided_slice %14 {offsets = [0, 0, 16], sizes = [1, 8, 8], strides = [1, 1, 1]} : vector<1x8x32xf32> to vector<1x8x8xf32>
    %46 = vector.extract_strided_slice %15 {offsets = [0, 0, 16], sizes = [1, 8, 8], strides = [1, 1, 1]} : vector<1x8x32xf32> to vector<1x8x8xf32>
    %47 = vector.extract_strided_slice %16 {offsets = [0, 0, 16], sizes = [1, 8, 8], strides = [1, 1, 1]} : vector<1x8x32xf32> to vector<1x8x8xf32>
    "tpu.trace_start"() <{level = 10 : i32, message = "bqd,bkd->bqk"}> : () -> ()
    %cst_22 = arith.constant dense<0.000000e+00> : vector<1x8x8xf32>
    %48 = tpu.matmul %45, %46, %cst_22 {dimension_numbers = #tpu.dot_dimension_numbers<[2], [2], [1], [1], [0, 0, 0, 1, 1, 1], [0], [0]>} : vector<1x8x8xf32>, vector<1x8x8xf32>, vector<1x8x8xf32> -> vector<1x8x8xf32>
    "tpu.trace_stop"() : () -> ()
    %cst_23 = arith.constant dense<0xFF800000> : vector<1x8xf32>
    %49 = vector.multi_reduction <maximumf>, %48, %cst_23 [2] : vector<1x8x8xf32> to vector<1x8xf32>
    %50 = vector.shape_cast %49 : vector<1x8xf32> to vector<1x8x1xf32>
    %51 = vector.broadcast %50 : vector<1x8x1xf32> to vector<1x8x8xf32>
    %52 = arith.subf %48, %51 : vector<1x8x8xf32>
    %53 = math.exp %52 : vector<1x8x8xf32>
    %cst_24 = arith.constant dense<0.000000e+00> : vector<1x8xf32>
    %54 = vector.multi_reduction <add>, %53, %cst_24 [2] : vector<1x8x8xf32> to vector<1x8xf32>
    %55 = vector.shape_cast %54 : vector<1x8xf32> to vector<1x8x1xf32>
    %56 = vector.broadcast %55 : vector<1x8x1xf32> to vector<1x8x8xf32>
    %57 = arith.divf %53, %56 : vector<1x8x8xf32>
    "tpu.trace_start"() <{level = 10 : i32, message = "bqk,bkd->bqd"}> : () -> ()
    %cst_25 = arith.constant dense<0.000000e+00> : vector<1x8x8xf32>
    %58 = tpu.matmul %57, %47, %cst_25 {dimension_numbers = #tpu.dot_dimension_numbers<[2], [1], [1], [2], [0, 0, 0, 1, 1, 2], [0], [0]>} : vector<1x8x8xf32>, vector<1x8x8xf32>, vector<1x8x8xf32> -> vector<1x8x8xf32>
    "tpu.trace_stop"() : () -> ()
    %59 = vector.extract_strided_slice %14 {offsets = [0, 0, 24], sizes = [1, 8, 8], strides = [1, 1, 1]} : vector<1x8x32xf32> to vector<1x8x8xf32>
    %60 = vector.extract_strided_slice %15 {offsets = [0, 0, 24], sizes = [1, 8, 8], strides = [1, 1, 1]} : vector<1x8x32xf32> to vector<1x8x8xf32>
    %61 = vector.extract_strided_slice %16 {offsets = [0, 0, 24], sizes = [1, 8, 8], strides = [1, 1, 1]} : vector<1x8x32xf32> to vector<1x8x8xf32>
    "tpu.trace_start"() <{level = 10 : i32, message = "bqd,bkd->bqk"}> : () -> ()
    %cst_26 = arith.constant dense<0.000000e+00> : vector<1x8x8xf32>
    %62 = tpu.matmul %59, %60, %cst_26 {dimension_numbers = #tpu.dot_dimension_numbers<[2], [2], [1], [1], [0, 0, 0, 1, 1, 1], [0], [0]>} : vector<1x8x8xf32>, vector<1x8x8xf32>, vector<1x8x8xf32> -> vector<1x8x8xf32>
    "tpu.trace_stop"() : () -> ()
    %cst_27 = arith.constant dense<0xFF800000> : vector<1x8xf32>
    %63 = vector.multi_reduction <maximumf>, %62, %cst_27 [2] : vector<1x8x8xf32> to vector<1x8xf32>
    %64 = vector.shape_cast %63 : vector<1x8xf32> to vector<1x8x1xf32>
    %65 = vector.broadcast %64 : vector<1x8x1xf32> to vector<1x8x8xf32>
    %66 = arith.subf %62, %65 : vector<1x8x8xf32>
    %67 = math.exp %66 : vector<1x8x8xf32>
    %cst_28 = arith.constant dense<0.000000e+00> : vector<1x8xf32>
    %68 = vector.multi_reduction <add>, %67, %cst_28 [2] : vector<1x8x8xf32> to vector<1x8xf32>
    %69 = vector.shape_cast %68 : vector<1x8xf32> to vector<1x8x1xf32>
    %70 = vector.broadcast %69 : vector<1x8x1xf32> to vector<1x8x8xf32>
    %71 = arith.divf %67, %70 : vector<1x8x8xf32>
    "tpu.trace_start"() <{level = 10 : i32, message = "bqk,bkd->bqd"}> : () -> ()
    %cst_29 = arith.constant dense<0.000000e+00> : vector<1x8x8xf32>
    %72 = tpu.matmul %71, %61, %cst_29 {dimension_numbers = #tpu.dot_dimension_numbers<[2], [1], [1], [2], [0, 0, 0, 1, 1, 2], [0], [0]>} : vector<1x8x8xf32>, vector<1x8x8xf32>, vector<1x8x8xf32> -> vector<1x8x8xf32>
    "tpu.trace_stop"() : () -> ()
    %73 = tpu.concatenate %30, %44, %58, %72 in 2 : vector<1x8x8xf32>, vector<1x8x8xf32>, vector<1x8x8xf32>, vector<1x8x8xf32> -> vector<1x8x32xf32>
    %74 = arith.addf %14, %73 : vector<1x8x32xf32>
    %75 = vector.shape_cast %74 : vector<1x8x32xf32> to vector<8x32xf32>
    %c0_30 = arith.constant 0 : index
    %c0_31 = arith.constant 0 : index
    %c0_32 = arith.constant 0 : index
    %76 = vector.load %arg6[%c0_30, %c0_31, %c0_32] : memref<1x32x32xf32, #tpu.memory_space<vmem>>, vector<1x32x32xf32>
    %77 = vector.shape_cast %76 : vector<1x32x32xf32> to vector<32x32xf32>
    %cst_33 = arith.constant dense<0.000000e+00> : vector<8x32xf32>
    %78 = tpu.matmul %75, %77, %cst_33 {dimension_numbers = #tpu.dot_dimension_numbers<[1], [0], [0], [1], [0, 0, 1, 1], [], []>} : vector<8x32xf32>, vector<32x32xf32>, vector<8x32xf32> -> vector<8x32xf32>
    %cst_34 = arith.constant 0.000000e+00 : f32
    %79 = vector.broadcast %cst_34 : f32 to vector<8x32xf32>
    %80 = arith.maximumf %78, %79 : vector<8x32xf32>
    %81 = arith.addf %75, %80 : vector<8x32xf32>
    %82 = vector.shape_cast %81 : vector<8x32xf32> to vector<1x8x32xf32>
    %c0_35 = arith.constant 0 : index
    %c0_36 = arith.constant 0 : index
    %c0_37 = arith.constant 0 : index
    %83 = vector.load %arg8[%c0_35, %c0_36, %c0_37] : memref<1x8x32xf32, #tpu.memory_space<vmem>>, vector<1x8x32xf32>
    tpu.vector_store %arg8[%c0_35, %c0_36, %c0_37], %82 {strides = array<i32>} : memref<1x8x32xf32, #tpu.memory_space<vmem>>, vector<1x8x32xf32>,
    %c1_i32 = arith.constant 1 : i32
    %84 = arith.cmpi eq, %arg1, %c1_i32 : i32
    %85 = arith.extui %84 : i1 to i32
    %c0_i32_38 = arith.constant 0 : i32
    %86 = arith.cmpi ne, %85, %c0_i32_38 : i32
    scf.if %86 {
      %c0_39 = arith.constant 0 : index
      %c0_40 = arith.constant 0 : index
      %c0_41 = arith.constant 0 : index
      %87 = vector.load %arg7[%c0_39, %c0_40, %c0_41] : memref<1x8x32xf32, #tpu.memory_space<vmem>>, vector<1x8x32xf32>
      tpu.vector_store %arg7[%c0_39, %c0_40, %c0_41], %82 {strides = array<i32>} : memref<1x8x32xf32, #tpu.memory_space<vmem>>, vector<1x8x32xf32>,
    } else {
    }
    return
  }
  func.func @transform_0(%arg0: i32, %arg1: i32) -> (i32, i32, i32) {
    %c0_i32 = arith.constant 0 : i32
    %c0_i32_0 = arith.constant 0 : i32
    %c0_i32_1 = arith.constant 0 : i32
    return %arg0, %c0_i32, %c0_i32_0 : i32, i32, i32
  }
  func.func @transform_1(%arg0: i32, %arg1: i32) -> (i32, i32, i32) {
    %c0_i32 = arith.constant 0 : i32
    %c0_i32_0 = arith.constant 0 : i32
    %c0_i32_1 = arith.constant 0 : i32
    return %arg1, %c0_i32, %c0_i32_0 : i32, i32, i32
  }
  func.func @transform_2(%arg0: i32, %arg1: i32) -> (i32, i32, i32) {
    %c0_i32 = arith.constant 0 : i32
    %c0_i32_0 = arith.constant 0 : i32
    %c0_i32_1 = arith.constant 0 : i32
    return %arg1, %c0_i32, %c0_i32_0 : i32, i32, i32
  }
  func.func @transform_3(%arg0: i32, %arg1: i32) -> (i32, i32, i32) {
    %c0_i32 = arith.constant 0 : i32
    %c0_i32_0 = arith.constant 0 : i32
    %c0_i32_1 = arith.constant 0 : i32
    return %arg1, %c0_i32, %c0_i32_0 : i32, i32, i32
  }
  func.func @transform_4(%arg0: i32, %arg1: i32) -> (i32, i32, i32) {
    %c0_i32 = arith.constant 0 : i32
    %c0_i32_0 = arith.constant 0 : i32
    %c0_i32_1 = arith.constant 0 : i32
    return %arg1, %c0_i32, %c0_i32_0 : i32, i32, i32
  }
  func.func @transform_5(%arg0: i32, %arg1: i32) -> (i32, i32, i32) {
    %c0_i32 = arith.constant 0 : i32
    %c0_i32_0 = arith.constant 0 : i32
    %c0_i32_1 = arith.constant 0 : i32
    return %arg0, %c0_i32, %c0_i32_0 : i32, i32, i32
  }
}

</mosaic_0001>

<llo_original>
// kernel: tpu_custom_call.1
$region0: #{tpu_custom_call.1}
  #allocation0 [shape = 'u32[]', space=smem, size = 0x4, offset = 0x4, fixed_abs, tag = 'smem constant byte address 0x4 - core index']
  #allocation1 [shape = 'u32[72,128]{1,0:T(1,128)}', space=vmem, size = 0x9000, scoped, tag = 'internal scratch']
  #allocation2 [shape = 'f32[1,8,32]{2,1,0:T(8,128)}', space=vmem, size = 0x1000, scoped, tag = 'scratch operand']
  %s0 = inlined_call_operand.hbm [shape: f32[2,8,32], index: 0, kind: input, shape index: {}]
  %s1 = inlined_call_operand.hbm [shape: f32[2,32,32], index: 1, kind: input, shape index: {}]
  %s2 = inlined_call_operand.hbm [shape: f32[2,32,32], index: 2, kind: input, shape index: {}]
  %s3 = inlined_call_operand.hbm [shape: f32[2,32,32], index: 3, kind: input, shape index: {}]
  %s4 = inlined_call_operand.hbm [shape: f32[2,32,32], index: 4, kind: input, shape index: {}]
  %s5 = inlined_call_operand.hbm [shape: f32[2,8,32], index: 5, kind: output, shape index: {}]
  %s6 = sld [smem:[#allocation0]]
  $region81: #{tpu_custom_call.1} parent=0
    _
  %s8 = ssub.s32 1, %s6
  %s9 = scalar_select 0, %s8, %s6
  $region1: #{tpu_custom_call.1} parent=0
    #allocation3 [shape = 'u8[8192]{0}', space=vmem, size = 0x2000, scoped, tag = 'input window, operand 0']
    #allocation4 [shape = 's32[2]{0}', space=sflag, size = 0x8, scoped, tag = 'scoped memory for tpu_custom_call.1']
    #allocation5 [shape = 's32[2]{0}', space=sflag, size = 0x8, scoped, tag = 'scoped memory for tpu_custom_call.1']
    #allocation6 [shape = 'u8[32768]{0}', space=vmem, size = 0x8000, scoped, tag = 'input window, operand 1']
    #allocation7 [shape = 's32[2]{0}', space=sflag, size = 0x8, scoped, tag = 'scoped memory for tpu_custom_call.1']
    #allocation8 [shape = 'u8[32768]{0}', space=vmem, size = 0x8000, scoped, tag = 'input window, operand 2']
    #allocation9 [shape = 'u8[32768]{0}', space=vmem, size = 0x8000, scoped, tag = 'input window, operand 3']
    #allocation10 [shape = 's32[2]{0}', space=sflag, size = 0x8, scoped, tag = 'scoped memory for tpu_custom_call.1']
    #allocation11 [shape = 'u8[32768]{0}', space=vmem, size = 0x8000, scoped, tag = 'input window, operand 4']
    #allocation12 [shape = 'u8[8192]{0}', space=vmem, size = 0x2000, scoped, tag = 'output window, operand 0']
    %10 = vsyncpa [#allocation4], 0
    %s11 = scalar_lea.sflag [#allocation4], 1
    %12 = vsyncpa %s11, 0
    %13 = vsyncpa [#allocation7], 0
    %s14 = scalar_lea.sflag [#allocation7], 1
    %15 = vsyncpa %s14, 0
    %16 = vsyncpa [#allocation10], 0
    %s17 = scalar_lea.sflag [#allocation10], 1
    %18 = vsyncpa %s17, 0
    %19 = vsyncpa [#allocation5], 0
    %s20 = scalar_lea.sflag [#allocation5], 1
    %21 = vsyncpa %s20, 0
    loop: start=0, step=1, limit=6
    $region2: #{tpu_custom_call.1} parent=1 // loop_pre_header
      _
    $region3: #{tpu_custom_call.1} parent=1 // loop_header
      %s23 = sphi 0, %s27
      %p24 = scmp.ge.s32.totalorder %s23, 6
      %s30 = sphi 0, %s42
      %s31 = sphi 0, %s38
      %s32 = sphi 0, %s30
      %s33 = sphi 0, %s31
      %s34 = sphi 0, %s32
      %s35 = sphi 0, %s33
      %s45 = sphi 0, %s47
      %s48 = sphi 0, %s45
      %s49 = sphi 0, %s48
      %s65 = sphi 0, %s49
      %s71 = sphi 0, %s73
      %s74 = sphi 0, %s71
      %s75 = sphi 0, %s74
      %s91 = sphi 0, %s75
      %s97 = sphi 0, %s99
      %s100 = sphi 0, %s97
      %s101 = sphi 0, %s100
      %s117 = sphi 0, %s101
      %s123 = sphi 0, %s125
      %s126 = sphi 0, %s123
      %s127 = sphi 0, %s126
      %s143 = sphi 0, %s127
      %s149 = sphi 0, %s151
      %s152 = sphi 0, %s149
      %s153 = sphi 0, %s152
      %s169 = sphi 0, %s153
      %s175 = sphi 0, %s177
      %s178 = sphi 0, %s175
      %s179 = sphi 0, %s178
      %s195 = sphi 0, %s179
    $region4: #{tpu_custom_call.1} parent=1 // loop_header_branch
      %26 = sbr.rel (%p24) target = $region8
    $region5: #{tpu_custom_call.1} parent=1 // loop_body
      %s28 = ssub.s32 %s23, 1
      %s29 = ssub.s32 %s23, 2
      %s36 = sadd.s32 1, %s31
      %p37 = scmp.ge.s32.totalorder %s36, 2
      %s38 = scalar_select %p37, 0, %s36
      %s39 = sadd.s32 1, %s30
      %s40 = scalar_select %p37, %s39, %s30
      %p41 = scmp.ge.s32.totalorder %s40, 2
      %s42 = scalar_select %p41, 0, %s40
      %s43 = ssub.s32 %s30, %s42
      %p44 = scmp.eq.s32.totalorder %s43, 0
      %s46 = sadd.s32 %s45, 1
      %s47 = scalar_select %p44, %s45, %s46
      %p50 = pneg %p44
      %p51 = scmp.eq.s32.totalorder %s23, 3
      %p52 = por %p50, %p51
      %p53 = scmp.ne.s32.totalorder %s45, %s48
      %p54 = scmp.eq.s32.totalorder %s23, 0
      %p55 = por %p53, %p54
      %p56 = scmp.ne.s32.totalorder %s45, %s48
      %p57 = scmp.eq.s32.totalorder %s28, 3
      %p58 = por %p56, %p57
      %p59 = scmp.ne.s32.totalorder %s48, %s49
      %p60 = scmp.eq.s32.totalorder %s28, 0
      %p61 = por %p59, %p60
      %p62 = scmp.ne.s32.totalorder %s48, %s49
      %p63 = scmp.eq.s32.totalorder %s29, 3
      %p64 = por %p62, %p63
      %p66 = scmp.ne.s32.totalorder %s49, %s65
      %p67 = scmp.eq.s32.totalorder %s29, 0
      %p68 = por %p66, %p67
      %s69 = ssub.s32 %s31, %s38
      %p70 = scmp.eq.s32.totalorder %s69, 0
      %s72 = sadd.s32 %s71, 1
      %s73 = scalar_select %p70, %s71, %s72
      %p76 = pneg %p70
      %p77 = scmp.eq.s32.totalorder %s23, 3
      %p78 = por %p76, %p77
      %p79 = scmp.ne.s32.totalorder %s71, %s74
      %p80 = scmp.eq.s32.totalorder %s23, 0
      %p81 = por %p79, %p80
      %p82 = scmp.ne.s32.totalorder %s71, %s74
      %p83 = scmp.eq.s32.totalorder %s28, 3
      %p84 = por %p82, %p83
      %p85 = scmp.ne.s32.totalorder %s74, %s75
      %p86 = scmp.eq.s32.totalorder %s28, 0
      %p87 = por %p85, %p86
      %p88 = scmp.ne.s32.totalorder %s74, %s75
      %p89 = scmp.eq.s32.totalorder %s29, 3
      %p90 = por %p88, %p89
      %p92 = scmp.ne.s32.totalorder %s75, %s91
      %p93 = scmp.eq.s32.totalorder %s29, 0
      %p94 = por %p92, %p93
      %s95 = ssub.s32 %s31, %s38
      %p96 = scmp.eq.s32.totalorder %s95, 0
      %s98 = sadd.s32 %s97, 1
      %s99 = scalar_select %p96, %s97, %s98
      %p102 = pneg %p96
      %p103 = scmp.eq.s32.totalorder %s23, 3
      %p104 = por %p102, %p103
      %p105 = scmp.ne.s32.totalorder %s97, %s100
      %p106 = scmp.eq.s32.totalorder %s23, 0
      %p107 = por %p105, %p106
      %p108 = scmp.ne.s32.totalorder %s97, %s100
      %p109 = scmp.eq.s32.totalorder %s28, 3
      %p110 = por %p108, %p109
      %p111 = scmp.ne.s32.totalorder %s100, %s101
      %p112 = scmp.eq.s32.totalorder %s28, 0
      %p113 = por %p111, %p112
      %p114 = scmp.ne.s32.totalorder %s100, %s101
      %p115 = scmp.eq.s32.totalorder %s29, 3
      %p116 = por %p114, %p115
      %p118 = scmp.ne.s32.totalorder %s101, %s117
      %p119 = scmp.eq.s32.totalorder %s29, 0
      %p120 = por %p118, %p119
      %s121 = ssub.s32 %s31, %s38
      %p122 = scmp.eq.s32.totalorder %s121, 0
      %s124 = sadd.s32 %s123, 1
      %s125 = scalar_select %p122, %s123, %s124
      %p128 = pneg %p122
      %p129 = scmp.eq.s32.totalorder %s23, 3
      %p130 = por %p128, %p129
      %p131 = scmp.ne.s32.totalorder %s123, %s126
      %p132 = scmp.eq.s32.totalorder %s23, 0
      %p133 = por %p131, %p132
      %p134 = scmp.ne.s32.totalorder %s123, %s126
      %p135 = scmp.eq.s32.totalorder %s28, 3
      %p136 = por %p134, %p135
      %p137 = scmp.ne.s32.totalorder %s126, %s127
      %p138 = scmp.eq.s32.totalorder %s28, 0
      %p139 = por %p137, %p138
      %p140 = scmp.ne.s32.totalorder %s126, %s127
      %p141 = scmp.eq.s32.totalorder %s29, 3
      %p142 = por %p140, %p141
      %p144 = scmp.ne.s32.totalorder %s127, %s143
      %p145 = scmp.eq.s32.totalorder %s29, 0
      %p146 = por %p144, %p145
      %s147 = ssub.s32 %s31, %s38
      %p148 = scmp.eq.s32.totalorder %s147, 0
      %s150 = sadd.s32 %s149, 1
      %s151 = scalar_select %p148, %s149, %s150
      %p154 = pneg %p148
      %p155 = scmp.eq.s32.totalorder %s23, 3
      %p156 = por %p154, %p155
      %p157 = scmp.ne.s32.totalorder %s149, %s152
      %p158 = scmp.eq.s32.totalorder %s23, 0
      %p159 = por %p157, %p158
      %p160 = scmp.ne.s32.totalorder %s149, %s152
      %p161 = scmp.eq.s32.totalorder %s28, 3
      %p162 = por %p160, %p161
      %p163 = scmp.ne.s32.totalorder %s152, %s153
      %p164 = scmp.eq.s32.totalorder %s28, 0
      %p165 = por %p163, %p164
      %p166 = scmp.ne.s32.totalorder %s152, %s153
      %p167 = scmp.eq.s32.totalorder %s29, 3
      %p168 = por %p166, %p167
      %p170 = scmp.ne.s32.totalorder %s153, %s169
      %p171 = scmp.eq.s32.totalorder %s29, 0
      %p172 = por %p170, %p171
      %s173 = ssub.s32 %s30, %s42
      %p174 = scmp.eq.s32.totalorder %s173, 0
      %s176 = sadd.s32 %s175, 1
      %s177 = scalar_select %p174, %s175, %s176
      %p180 = pneg %p174
      %p181 = scmp.eq.s32.totalorder %s23, 3
      %p182 = por %p180, %p181
      %p183 = scmp.ne.s32.totalorder %s175, %s178
      %p184 = scmp.eq.s32.totalorder %s23, 0
      %p185 = por %p183, %p184
      %p186 = scmp.ne.s32.totalorder %s175, %s178
      %p187 = scmp.eq.s32.totalorder %s28, 3
      %p188 = por %p186, %p187
      %p189 = scmp.ne.s32.totalorder %s178, %s179
      %p190 = scmp.eq.s32.totalorder %s28, 0
      %p191 = por %p189, %p190
      %p192 = scmp.ne.s32.totalorder %s178, %s179
      %p193 = scmp.eq.s32.totalorder %s29, 3
      %p194 = por %p192, %p193
      %p196 = scmp.ne.s32.totalorder %s179, %s195
      %p197 = scmp.eq.s32.totalorder %s29, 0
      %p198 = por %p196, %p197
      %p199 = scmp.le.s32.totalorder 1, %s23
      %p200 = scmp.lt.s32.totalorder %s23, 5
      %p201 = pnand %p199, %p200
      %p202 = pneg %p201
      // Predicated region
      $region9: #{tpu_custom_call.1} parent=5 // pred_check
        _
      $region10: #{tpu_custom_call.1} parent=5 // pred_check_branch
        %204 = sbr.rel (%p201) target = $region12
      $region11: #{tpu_custom_call.1} parent=5 // pred_region
        %s205 = ssub.s32 %s23, 1
      $region12: #{tpu_custom_call.1} parent=5 // pred_fallthru
        _
      %p206 = scmp.lt.s32.totalorder %s23, 4
      // Predicated region
      $region13: #{tpu_custom_call.1} parent=5 // pred_check
        %p207 = pneg %p206
      $region14: #{tpu_custom_call.1} parent=5 // pred_check_branch
        %209 = sbr.rel (%p207) target = $region16
      $region15: #{tpu_custom_call.1} parent=5 // pred_region
        // Predicated region
        $region17: #{tpu_custom_call.1} parent=15 // pred_check
          %p210 = pneg %p55
        $region18: #{tpu_custom_call.1} parent=15 // pred_check_branch
          %212 = sbr.rel (%p210) target = $region20
        $region19: #{tpu_custom_call.1} parent=15 // pred_region
          %s213 = sand.u32 %s45, 1
          %s214 = scalar_lea.sflag [#allocation4], %s213
          %s215 = sand.u32 %s45, 1
          %s216 = smul.addr %s215, 8
          %s217 = scalar_lea.vmem [#allocation3], %s216
          %219 = vsyncadd %s214, 0
          %s220 = smul.addr %s30, 8
          %s221 = scalar_lea.hbm %s0, %s220
          %s223 = sshll.u32 %s221, 4
          %s224 = int_to_ptr.hbm [resolvable:$true] %s223
          %s225 = sshll.u32 %s217, 4
          %s226 = int_to_ptr.vmem [resolvable:$true] %s225
          %228 = dma.hbm_to_vmem [thread:$0]  %s224, 128, %s226, %s214
        $region20: #{tpu_custom_call.1} parent=15 // pred_fallthru
          _
        // Predicated region
        $region21: #{tpu_custom_call.1} parent=15 // pred_check
          %p229 = pneg %p81
        $region22: #{tpu_custom_call.1} parent=15 // pred_check_branch
          %231 = sbr.rel (%p229) target = $region24
        $region23: #{tpu_custom_call.1} parent=15 // pred_region
          %s232 = sand.u32 %s23, 1
          %s233 = scalar_lea.sflag [#allocation7], %s232
          %s234 = sand.u32 %s71, 1
          %s235 = smul.addr %s234, 32
          %s236 = scalar_lea.vmem [#allocation6], %s235
          %238 = vsyncadd %s233, 0
          %s239 = smul.addr %s31, 4
          %s240 = smul.addr %s239, 8
          %s241 = scalar_lea.hbm %s1, %s240
          %s242 = sshll.u32 %s241, 4
          %s243 = int_to_ptr.hbm [resolvable:$true] %s242
          %s244 = sshll.u32 %s236, 4
          %s245 = int_to_ptr.vmem [resolvable:$true] %s244
          %250 = dma.hbm_to_vmem [thread:$0]  %s243, 512, %s245, %s233, 128, 128, 8
        $region24: #{tpu_custom_call.1} parent=15 // pred_fallthru
          _
        // Predicated region
        $region25: #{tpu_custom_call.1} parent=15 // pred_check
          %p251 = pneg %p107
        $region26: #{tpu_custom_call.1} parent=15 // pred_check_branch
          %253 = sbr.rel (%p251) target = $region28
        $region27: #{tpu_custom_call.1} parent=15 // pred_region
          %s254 = sand.u32 %s23, 1
          %s255 = scalar_lea.sflag [#allocation7], %s254
          %s256 = sand.u32 %s97, 1
          %s257 = smul.addr %s256, 32
          %s258 = scalar_lea.vmem [#allocation8], %s257
          %260 = vsyncadd %s255, 0
          %s261 = smul.addr %s31, 4
          %s262 = smul.addr %s261, 8
          %s263 = scalar_lea.hbm %s2, %s262
          %s264 = sshll.u32 %s263, 4
          %s265 = int_to_ptr.hbm [resolvable:$true] %s264
          %s266 = sshll.u32 %s258, 4
          %s267 = int_to_ptr.vmem [resolvable:$true] %s266
          %272 = dma.hbm_to_vmem [thread:$0]  %s265, 512, %s267, %s255, 128, 128, 8
        $region28: #{tpu_custom_call.1} parent=15 // pred_fallthru
          _
        // Predicated region
        $region29: #{tpu_custom_call.1} parent=15 // pred_check
          %p273 = pneg %p133
        $region30: #{tpu_custom_call.1} parent=15 // pred_check_branch
          %275 = sbr.rel (%p273) target = $region32
        $region31: #{tpu_custom_call.1} parent=15 // pred_region
          %s276 = sand.u32 %s23, 1
          %s277 = scalar_lea.sflag [#allocation10], %s276
          %s278 = sand.u32 %s123, 1
          %s279 = smul.addr %s278, 32
          %s280 = scalar_lea.vmem [#allocation9], %s279
          %282 = vsyncadd %s277, 0
          %s283 = smul.addr %s31, 4
          %s284 = smul.addr %s283, 8
          %s285 = scalar_lea.hbm %s3, %s284
          %s286 = sshll.u32 %s285, 4
          %s287 = int_to_ptr.hbm [resolvable:$true] %s286
          %s288 = sshll.u32 %s280, 4
          %s289 = int_to_ptr.vmem [resolvable:$true] %s288
          %294 = dma.hbm_to_vmem [thread:$0]  %s287, 512, %s289, %s277, 128, 128, 8
        $region32: #{tpu_custom_call.1} parent=15 // pred_fallthru
          _
        // Predicated region
        $region33: #{tpu_custom_call.1} parent=15 // pred_check
          %p295 = pneg %p159
        $region34: #{tpu_custom_call.1} parent=15 // pred_check_branch
          %297 = sbr.rel (%p295) target = $region36
        $region35: #{tpu_custom_call.1} parent=15 // pred_region
          %s298 = sand.u32 %s23, 1
          %s299 = scalar_lea.sflag [#allocation10], %s298
          %s300 = sand.u32 %s149, 1
          %s301 = smul.addr %s300, 32
          %s302 = scalar_lea.vmem [#allocation11], %s301
          %304 = vsyncadd %s299, 0
          %s305 = smul.addr %s31, 4
          %s306 = smul.addr %s305, 8
          %s307 = scalar_lea.hbm %s4, %s306
          %s308 = sshll.u32 %s307, 4
          %s309 = int_to_ptr.hbm [resolvable:$true] %s308
          %s310 = sshll.u32 %s302, 4
          %s311 = int_to_ptr.vmem [resolvable:$true] %s310
          %316 = dma.hbm_to_vmem [thread:$0]  %s309, 512, %s311, %s299, 128, 128, 8
        $region36: #{tpu_custom_call.1} parent=15 // pred_fallthru
          _
      $region16: #{tpu_custom_call.1} parent=5 // pred_fallthru
        _
      %p317 = scmp.le.s32.totalorder 1, %s23
      %p318 = scmp.lt.s32.totalorder %s23, 5
      %p319 = pnand %p317, %p318
      %p320 = pneg %p319
      // Predicated region
      $region37: #{tpu_custom_call.1} parent=5 // pred_check
        _
      $region38: #{tpu_custom_call.1} parent=5 // pred_check_branch
        %322 = sbr.rel (%p319) target = $region40
      $region39: #{tpu_custom_call.1} parent=5 // pred_region
        %s323 = ssub.s32 %s23, 1
        %s324 = sand.u32 %s48, 1
        %s325 = scalar_lea.sflag [#allocation4], %s324
        %s326 = sand.u32 %s48, 1
        %s327 = smul.addr %s326, 8
        %s328 = scalar_lea.vmem [#allocation3], %s327
        // Predicated region
        $region41: #{tpu_custom_call.1} parent=39 // pred_check
          %p329 = pneg %p61
        $region42: #{tpu_custom_call.1} parent=39 // pred_check_branch
          %331 = sbr.rel (%p329) target = $region44
        $region43: #{tpu_custom_call.1} parent=39 // pred_region
          %333 = dma.done %s325, 128
        $region44: #{tpu_custom_call.1} parent=39 // pred_fallthru
          _
        %s334 = sand.u32 %s28, 1
        %s335 = scalar_lea.sflag [#allocation7], %s334
        %s336 = sand.u32 %s74, 1
        %s337 = smul.addr %s336, 32
        %s338 = scalar_lea.vmem [#allocation6], %s337
        // Predicated region
        $region45: #{tpu_custom_call.1} parent=39 // pred_check
          %p339 = pneg %p87
        $region46: #{tpu_custom_call.1} parent=39 // pred_check_branch
          %341 = sbr.rel (%p339) target = $region48
        $region47: #{tpu_custom_call.1} parent=39 // pred_region
          %343 = dma.done %s335, 512
        $region48: #{tpu_custom_call.1} parent=39 // pred_fallthru
          _
        %s344 = sand.u32 %s28, 1
        %s345 = scalar_lea.sflag [#allocation7], %s344
        %s346 = sand.u32 %s100, 1
        %s347 = smul.addr %s346, 32
        %s348 = scalar_lea.vmem [#allocation8], %s347
        // Predicated region
        $region49: #{tpu_custom_call.1} parent=39 // pred_check
          %p349 = pneg %p113
        $region50: #{tpu_custom_call.1} parent=39 // pred_check_branch
          %351 = sbr.rel (%p349) target = $region52
        $region51: #{tpu_custom_call.1} parent=39 // pred_region
          %353 = dma.done %s345, 512
        $region52: #{tpu_custom_call.1} parent=39 // pred_fallthru
          _
        %s354 = sand.u32 %s28, 1
        %s355 = scalar_lea.sflag [#allocation10], %s354
        %s356 = sand.u32 %s126, 1
        %s357 = smul.addr %s356, 32
        %s358 = scalar_lea.vmem [#allocation9], %s357
        // Predicated region
        $region53: #{tpu_custom_call.1} parent=39 // pred_check
          %p359 = pneg %p139
        $region54: #{tpu_custom_call.1} parent=39 // pred_check_branch
          %361 = sbr.rel (%p359) target = $region56
        $region55: #{tpu_custom_call.1} parent=39 // pred_region
          %363 = dma.done %s355, 512
        $region56: #{tpu_custom_call.1} parent=39 // pred_fallthru
          _
        %s364 = sand.u32 %s28, 1
        %s365 = scalar_lea.sflag [#allocation10], %s364
        %s366 = sand.u32 %s152, 1
        %s367 = smul.addr %s366, 32
        %s368 = scalar_lea.vmem [#allocation11], %s367
        // Predicated region
        $region57: #{tpu_custom_call.1} parent=39 // pred_check
          %p369 = pneg %p165
        $region58: #{tpu_custom_call.1} parent=39 // pred_check_branch
          %371 = sbr.rel (%p369) target = $region60
        $region59: #{tpu_custom_call.1} parent=39 // pred_region
          %373 = dma.done %s365, 512
        $region60: #{tpu_custom_call.1} parent=39 // pred_fallthru
          _
        %s374 = sand.u32 %s48, 1
        %s375 = scalar_lea.sflag [#allocation4], %s374
        %s376 = sand.u32 %s48, 1
        %s377 = smul.addr %s376, 8
        %s378 = scalar_lea.vmem [#allocation3], %s377
        %p379 = pneg %p61
        %p380 = pneg %p58
        %s381 = sand.u32 %s28, 1
        %s382 = scalar_lea.sflag [#allocation7], %s381
        %s383 = sand.u32 %s74, 1
        %s384 = smul.addr %s383, 32
        %s385 = scalar_lea.vmem [#allocation6], %s384
        %p386 = pneg %p87
        %p387 = pneg %p84
        %s388 = sand.u32 %s28, 1
        %s389 = scalar_lea.sflag [#allocation7], %s388
        %s390 = sand.u32 %s100, 1
        %s391 = smul.addr %s390, 32
        %s392 = scalar_lea.vmem [#allocation8], %s391
        %p393 = pneg %p113
        %p394 = pneg %p110
        %s395 = sand.u32 %s28, 1
        %s396 = scalar_lea.sflag [#allocation10], %s395
        %s397 = sand.u32 %s126, 1
        %s398 = smul.addr %s397, 32
        %s399 = scalar_lea.vmem [#allocation9], %s398
        %p400 = pneg %p139
        %p401 = pneg %p136
        %s402 = sand.u32 %s28, 1
        %s403 = scalar_lea.sflag [#allocation10], %s402
        %s404 = sand.u32 %s152, 1
        %s405 = smul.addr %s404, 32
        %s406 = scalar_lea.vmem [#allocation11], %s405
        %p407 = pneg %p165
        %p408 = pneg %p162
        %p409 = pneg %p191
        %p410 = pneg %p188
        %s411 = sand.u32 %s178, 1
        %s412 = scalar_lea.sflag [#allocation5], %s411
        %s413 = sand.u32 %s178, 1
        %s414 = smul.addr %s413, 8
        %s415 = scalar_lea.vmem [#allocation12], %s414
        %p416 = scmp.eq.s32.totalorder %s33, 0
        // Predicated region
        $region61: #{tpu_custom_call.1} parent=39 // pred_check
          %p417 = pneg %p416
        $region62: #{tpu_custom_call.1} parent=39 // pred_check_branch
          %419 = sbr.rel (%p417) target = $region64
        $region63: #{tpu_custom_call.1} parent=39 // pred_region
          %v420 = vld [vmem:[%s328] sm:$0xff]
          %vm421 = vcmask 261120
          %422 = vst.msk [vmem:[#allocation2] sm:$0xff] %vm421, %v420
        $region64: #{tpu_custom_call.1} parent=39 // pred_fallthru
          _
        %v423 = vld [vmem:[#allocation2] sm:$0xff]
        %v424 = vld [vmem:[%s338] sm:$0xff]
        %v425 = vld [vmem:[%s338 + $0x8] sm:$0xff]
        %v426 = vld [vmem:[%s338 + $0x10] sm:$0xff]
        %v427 = vld [vmem:[%s338 + $0x18] sm:$0xff]
        %vm428 = vcmask 261120
        %v430 = vsel %vm428, %v423, 0
        %432 = vmatpush.msra.mxu0 0.0
        %433 = vmatpush.msra.mxu0 0.0
        %434 = vmatpush.msra.mxu0 0.0
        %435 = vmatpush.msra.mxu0 0.0
        %436 = vmatpush.msra.mxu0 0.0
        %437 = vmatpush.msra.mxu0 0.0
        %438 = vmatpush.msra.mxu0 0.0
        %439 = vmatpush.msra.mxu0 0.0
        %440 = vmatpush.msra.mxu0 0.0
        %441 = vmatpush.msra.mxu0 0.0
        %442 = vmatpush.msra.mxu0 0.0
        %443 = vmatpush.msra.mxu0 0.0
        %444 = vmatpush.msra.mxu0 %v427
        %445 = vmatpush.msra.mxu0 %v426
        %446 = vmatpush.msra.mxu0 %v425
        %447 = vmatpush.msra.mxu0 %v424
        %448 = vmatmul.f32.gmra.mxu0 %v430
        %v449 = vpop.f32.mrf.mxu0
        %v450 = vadd.f32 0.0, %v449
        %451 = vdwg.mxu0
        %v452 = vld [vmem:[%s348] sm:$0xff]
        %v453 = vld [vmem:[%s348 + $0x8] sm:$0xff]
        %v454 = vld [vmem:[%s348 + $0x10] sm:$0xff]
        %v455 = vld [vmem:[%s348 + $0x18] sm:$0xff]
        %456 = vmatpush.msra.mxu0 0.0
        %457 = vmatpush.msra.mxu0 0.0
        %458 = vmatpush.msra.mxu0 0.0
        %459 = vmatpush.msra.mxu0 0.0
        %460 = vmatpush.msra.mxu0 0.0
        %461 = vmatpush.msra.mxu0 0.0
        %462 = vmatpush.msra.mxu0 0.0
        %463 = vmatpush.msra.mxu0 0.0
        %464 = vmatpush.msra.mxu0 0.0
        %465 = vmatpush.msra.mxu0 0.0
        %466 = vmatpush.msra.mxu0 0.0
        %467 = vmatpush.msra.mxu0 0.0
        %468 = vmatpush.msra.mxu0 %v455
        %469 = vmatpush.msra.mxu0 %v454
        %470 = vmatpush.msra.mxu0 %v453
        %471 = vmatpush.msra.mxu0 %v452
        %472 = vmatmul.f32.gmra.mxu0 %v430
        %v473 = vpop.f32.mrf.mxu0
        %v474 = vadd.f32 0.0, %v473
        %475 = vdwg.mxu0
        %v476 = vld [vmem:[%s358] sm:$0xff]
        %v477 = vld [vmem:[%s358 + $0x8] sm:$0xff]
        %v478 = vld [vmem:[%s358 + $0x10] sm:$0xff]
        %v479 = vld [vmem:[%s358 + $0x18] sm:$0xff]
        %480 = vmatpush.msra.mxu0 0.0
        %481 = vmatpush.msra.mxu0 0.0
        %482 = vmatpush.msra.mxu0 0.0
        %483 = vmatpush.msra.mxu0 0.0
        %484 = vmatpush.msra.mxu0 0.0
        %485 = vmatpush.msra.mxu0 0.0
        %486 = vmatpush.msra.mxu0 0.0
        %487 = vmatpush.msra.mxu0 0.0
        %488 = vmatpush.msra.mxu0 0.0
        %489 = vmatpush.msra.mxu0 0.0
        %490 = vmatpush.msra.mxu0 0.0
        %491 = vmatpush.msra.mxu0 0.0
        %492 = vmatpush.msra.mxu0 %v479
        %493 = vmatpush.msra.mxu0 %v478
        %494 = vmatpush.msra.mxu0 %v477
        %495 = vmatpush.msra.mxu0 %v476
        %496 = vmatmul.f32.gmra.mxu0 %v430
        %v497 = vpop.f32.mrf.mxu0
        %v498 = vadd.f32 0.0, %v497
        %499 = vdwg.mxu0
        %vm500 = vcmask 64512
        %v502 = vsel %vm500, %v450, 0
        %v505 = vsel %vm500, %v474, 0
        %507 = vmatpush.xpose.msra.mxu0 0.0
        %508 = vmatpush.xpose.msra.mxu0 0.0
        %509 = vmatpush.xpose.msra.mxu0 0.0
        %510 = vmatpush.xpose.msra.mxu0 0.0
        %511 = vmatpush.xpose.msra.mxu0 0.0
        %512 = vmatpush.xpose.msra.mxu0 0.0
        %513 = vmatpush.xpose.msra.mxu0 0.0
        %514 = vmatpush.xpose.msra.mxu0 0.0
        %515 = vmatpush.xpose.msra.mxu0 0.0
        %516 = vmatpush.xpose.msra.mxu0 0.0
        %517 = vmatpush.xpose.msra.mxu0 0.0
        %518 = vmatpush.xpose.msra.mxu0 0.0
        %519 = vmatpush.xpose.msra.mxu0 0.0
        %520 = vmatpush.xpose.msra.mxu0 0.0
        %521 = vmatpush.xpose.msra.mxu0 0.0
        %522 = vmatpush.xpose.msra.mxu0 %v505
        %523 = vmatmul.f32.gmra.mxu0 %v502
        %v524 = vpop.f32.mrf.mxu0
        %v525 = vadd.f32 0.0, %v524
        %526 = vdwg.mxu0
        %v527 = vsel %vm500, %v525, -inf
        %528 = vmax.xlane.f32.xlu0 %v527
        %v529 = vpop.xlane.xlu0 %528
        %v530 = vsub.f32 %v525, %v529
        %v531 = vmul.f32 %v530, 1.442695
        %v532 = vpow.pop %v531
        %v533 = vsel %vm500, %v532, 0.0
        %534 = vadd.xlane.f32.xlu0 %v533
        %v535 = vpop.xlane.xlu0 %534
        %v536 = vrcp.pop %v535
        %v537 = vmul.f32 %v535, %v536
        %v538 = vsub.f32 1.0, %v537
        %v539 = vmul.f32 %v536, %v538
        %v540 = vadd.f32 %v536, %v539
        %vm541 = vweird.f32 %v535
        %vm542 = vweird.f32 %v536
        %vm543 = vmor %vm541, %vm542
        %v544 = vsel %vm543, %v536, %v540
        %v545 = vand.u32 2147483647, %v535
        %vm546 = vcmp.eq.f32.partialorder %v545, 8.507059e+37
        %v547 = vand.u32 %v535, 2147483648
        %v548 = vor.u32 1.1754944e-38, %v547
        %v549 = vsel %vm546, %v548, %v544
        %v550 = vmul.f32 %v532, %v549
        %v552 = vsel %vm500, %v550, 0
        %554 = vmatpush.msra.mxu0 0.0
        %555 = vmatpush.msra.mxu0 0.0
        %556 = vmatpush.msra.mxu0 0.0
        %557 = vmatpush.msra.mxu0 0.0
        %558 = vmatpush.msra.mxu0 0.0
        %559 = vmatpush.msra.mxu0 0.0
        %560 = vmatpush.msra.mxu0 0.0
        %561 = vmatpush.msra.mxu0 0.0
        %562 = vmatpush.msra.mxu0 0.0
        %563 = vmatpush.msra.mxu0 0.0
        %564 = vmatpush.msra.mxu0 0.0
        %565 = vmatpush.msra.mxu0 0.0
        %566 = vmatpush.msra.mxu0 0.0
        %567 = vmatpush.msra.mxu0 0.0
        %568 = vmatpush.msra.mxu0 0.0
        %569 = vmatpush.msra.mxu0 %v498
        %570 = vmatmul.f32.gmra.mxu0 %v552
        %v571 = vpop.f32.mrf.mxu0
        %v572 = vadd.f32 0.0, %v571
        %573 = vdwg.mxu0
        %574 = vrot.lane.b32.xlu0 %v450, 120
        %v575 = vpop.permute.xlu0 %574
        %576 = vrot.lane.b32.xlu0 %v474, 120
        %v577 = vpop.permute.xlu0 %576
        %v578 = vsel %vm500, %v575, 0
        %v580 = vsel %vm500, %v577, 0
        %582 = vmatpush.xpose.msra.mxu0 0.0
        %583 = vmatpush.xpose.msra.mxu0 0.0
        %584 = vmatpush.xpose.msra.mxu0 0.0
        %585 = vmatpush.xpose.msra.mxu0 0.0
        %586 = vmatpush.xpose.msra.mxu0 0.0
        %587 = vmatpush.xpose.msra.mxu0 0.0
        %588 = vmatpush.xpose.msra.mxu0 0.0
        %589 = vmatpush.xpose.msra.mxu0 0.0
        %590 = vmatpush.xpose.msra.mxu0 0.0
        %591 = vmatpush.xpose.msra.mxu0 0.0
        %592 = vmatpush.xpose.msra.mxu0 0.0
        %593 = vmatpush.xpose.msra.mxu0 0.0
        %594 = vmatpush.xpose.msra.mxu0 0.0
        %595 = vmatpush.xpose.msra.mxu0 0.0
        %596 = vmatpush.xpose.msra.mxu0 0.0
        %597 = vmatpush.xpose.msra.mxu0 %v580
        %598 = vmatmul.f32.gmra.mxu0 %v578
        %v599 = vpop.f32.mrf.mxu0
        %v600 = vadd.f32 0.0, %v599
        %601 = vdwg.mxu0
        %v602 = vsel %vm500, %v600, -inf
        %603 = vmax.xlane.f32.xlu0 %v602
        %v604 = vpop.xlane.xlu0 %603
        %v605 = vsub.f32 %v600, %v604
        %v606 = vmul.f32 %v605, 1.442695
        %v607 = vpow.pop %v606
        %v608 = vsel %vm500, %v607, 0.0
        %609 = vadd.xlane.f32.xlu0 %v608
        %v610 = vpop.xlane.xlu0 %609
        %v611 = vrcp.pop %v610
        %v612 = vmul.f32 %v610, %v611
        %v613 = vsub.f32 1.0, %v612
        %v614 = vmul.f32 %v611, %v613
        %v615 = vadd.f32 %v611, %v614
        %vm616 = vweird.f32 %v610
        %vm617 = vweird.f32 %v611
        %vm618 = vmor %vm616, %vm617
        %v619 = vsel %vm618, %v611, %v615
        %v620 = vand.u32 2147483647, %v610
        %vm621 = vcmp.eq.f32.partialorder %v620, 8.507059e+37
        %v622 = vand.u32 %v610, 2147483648
        %v623 = vor.u32 1.1754944e-38, %v622
        %v624 = vsel %vm621, %v623, %v619
        %v625 = vmul.f32 %v607, %v624
        %627 = vrot.lane.b32.xlu0 %v498, 120
        %v628 = vpop.permute.xlu0 %627
        %v631 = vsel %vm500, %v625, 0
        %633 = vmatpush.msra.mxu0 0.0
        %634 = vmatpush.msra.mxu0 0.0
        %635 = vmatpush.msra.mxu0 0.0
        %636 = vmatpush.msra.mxu0 0.0
        %637 = vmatpush.msra.mxu0 0.0
        %638 = vmatpush.msra.mxu0 0.0
        %639 = vmatpush.msra.mxu0 0.0
        %640 = vmatpush.msra.mxu0 0.0
        %641 = vmatpush.msra.mxu0 0.0
        %642 = vmatpush.msra.mxu0 0.0
        %643 = vmatpush.msra.mxu0 0.0
        %644 = vmatpush.msra.mxu0 0.0
        %645 = vmatpush.msra.mxu0 0.0
        %646 = vmatpush.msra.mxu0 0.0
        %647 = vmatpush.msra.mxu0 0.0
        %648 = vmatpush.msra.mxu0 %v628
        %649 = vmatmul.f32.gmra.mxu0 %v631
        %v650 = vpop.f32.mrf.mxu0
        %v651 = vadd.f32 0.0, %v650
        %652 = vdwg.mxu0
        %653 = vrot.lane.b32.xlu0 %v450, 112
        %v654 = vpop.permute.xlu0 %653
        %655 = vrot.lane.b32.xlu0 %v474, 112
        %v656 = vpop.permute.xlu0 %655
        %v657 = vsel %vm500, %v654, 0
        %v659 = vsel %vm500, %v656, 0
        %661 = vmatpush.xpose.msra.mxu0 0.0
        %662 = vmatpush.xpose.msra.mxu0 0.0
        %663 = vmatpush.xpose.msra.mxu0 0.0
        %664 = vmatpush.xpose.msra.mxu0 0.0
        %665 = vmatpush.xpose.msra.mxu0 0.0
        %666 = vmatpush.xpose.msra.mxu0 0.0
        %667 = vmatpush.xpose.msra.mxu0 0.0
        %668 = vmatpush.xpose.msra.mxu0 0.0
        %669 = vmatpush.xpose.msra.mxu0 0.0
        %670 = vmatpush.xpose.msra.mxu0 0.0
        %671 = vmatpush.xpose.msra.mxu0 0.0
        %672 = vmatpush.xpose.msra.mxu0 0.0
        %673 = vmatpush.xpose.msra.mxu0 0.0
        %674 = vmatpush.xpose.msra.mxu0 0.0
        %675 = vmatpush.xpose.msra.mxu0 0.0
        %676 = vmatpush.xpose.msra.mxu0 %v659
        %677 = vmatmul.f32.gmra.mxu0 %v657
        %v678 = vpop.f32.mrf.mxu0
        %v679 = vadd.f32 0.0, %v678
        %680 = vdwg.mxu0
        %v681 = vsel %vm500, %v679, -inf
        %682 = vmax.xlane.f32.xlu0 %v681
        %v683 = vpop.xlane.xlu0 %682
        %v684 = vsub.f32 %v679, %v683
        %v685 = vmul.f32 %v684, 1.442695
        %v686 = vpow.pop %v685
        %v687 = vsel %vm500, %v686, 0.0
        %688 = vadd.xlane.f32.xlu0 %v687
        %v689 = vpop.xlane.xlu0 %688
        %v690 = vrcp.pop %v689
        %v691 = vmul.f32 %v689, %v690
        %v692 = vsub.f32 1.0, %v691
        %v693 = vmul.f32 %v690, %v692
        %v694 = vadd.f32 %v690, %v693
        %vm695 = vweird.f32 %v689
        %vm696 = vweird.f32 %v690
        %vm697 = vmor %vm695, %vm696
        %v698 = vsel %vm697, %v690, %v694
        %v699 = vand.u32 2147483647, %v689
        %vm700 = vcmp.eq.f32.partialorder %v699, 8.507059e+37
        %v701 = vand.u32 %v689, 2147483648
        %v702 = vor.u32 1.1754944e-38, %v701
        %v703 = vsel %vm700, %v702, %v698
        %v704 = vmul.f32 %v686, %v703
        %705 = vrot.lane.b32.xlu0 %v498, 112
        %v706 = vpop.permute.xlu0 %705
        %v709 = vsel %vm500, %v704, 0
        %711 = vmatpush.msra.mxu0 0.0
        %712 = vmatpush.msra.mxu0 0.0
        %713 = vmatpush.msra.mxu0 0.0
        %714 = vmatpush.msra.mxu0 0.0
        %715 = vmatpush.msra.mxu0 0.0
        %716 = vmatpush.msra.mxu0 0.0
        %717 = vmatpush.msra.mxu0 0.0
        %718 = vmatpush.msra.mxu0 0.0
        %719 = vmatpush.msra.mxu0 0.0
        %720 = vmatpush.msra.mxu0 0.0
        %721 = vmatpush.msra.mxu0 0.0
        %722 = vmatpush.msra.mxu0 0.0
        %723 = vmatpush.msra.mxu0 0.0
        %724 = vmatpush.msra.mxu0 0.0
        %725 = vmatpush.msra.mxu0 0.0
        %726 = vmatpush.msra.mxu0 %v706
        %727 = vmatmul.f32.gmra.mxu0 %v709
        %v728 = vpop.f32.mrf.mxu0
        %v729 = vadd.f32 0.0, %v728
        %730 = vdwg.mxu0
        %731 = vrot.lane.b32.xlu0 %v450, 104
        %v732 = vpop.permute.xlu0 %731
        %733 = vrot.lane.b32.xlu0 %v474, 104
        %v734 = vpop.permute.xlu0 %733
        %v735 = vsel %vm500, %v732, 0
        %v737 = vsel %vm500, %v734, 0
        %739 = vmatpush.xpose.msra.mxu0 0.0
        %740 = vmatpush.xpose.msra.mxu0 0.0
        %741 = vmatpush.xpose.msra.mxu0 0.0
        %742 = vmatpush.xpose.msra.mxu0 0.0
        %743 = vmatpush.xpose.msra.mxu0 0.0
        %744 = vmatpush.xpose.msra.mxu0 0.0
        %745 = vmatpush.xpose.msra.mxu0 0.0
        %746 = vmatpush.xpose.msra.mxu0 0.0
        %747 = vmatpush.xpose.msra.mxu0 0.0
        %748 = vmatpush.xpose.msra.mxu0 0.0
        %749 = vmatpush.xpose.msra.mxu0 0.0
        %750 = vmatpush.xpose.msra.mxu0 0.0
        %751 = vmatpush.xpose.msra.mxu0 0.0
        %752 = vmatpush.xpose.msra.mxu0 0.0
        %753 = vmatpush.xpose.msra.mxu0 0.0
        %754 = vmatpush.xpose.msra.mxu0 %v737
        %755 = vmatmul.f32.gmra.mxu0 %v735
        %v756 = vpop.f32.mrf.mxu0
        %v757 = vadd.f32 0.0, %v756
        %758 = vdwg.mxu0
        %v759 = vsel %vm500, %v757, -inf
        %760 = vmax.xlane.f32.xlu0 %v759
        %v761 = vpop.xlane.xlu0 %760
        %v762 = vsub.f32 %v757, %v761
        %v763 = vmul.f32 %v762, 1.442695
        %v764 = vpow.pop %v763
        %v765 = vsel %vm500, %v764, 0.0
        %766 = vadd.xlane.f32.xlu0 %v765
        %v767 = vpop.xlane.xlu0 %766
        %v768 = vrcp.pop %v767
        %v769 = vmul.f32 %v767, %v768
        %v770 = vsub.f32 1.0, %v769
        %v771 = vmul.f32 %v768, %v770
        %v772 = vadd.f32 %v768, %v771
        %vm773 = vweird.f32 %v767
        %vm774 = vweird.f32 %v768
        %vm775 = vmor %vm773, %vm774
        %v776 = vsel %vm775, %v768, %v772
        %v777 = vand.u32 2147483647, %v767
        %vm778 = vcmp.eq.f32.partialorder %v777, 8.507059e+37
        %v779 = vand.u32 %v767, 2147483648
        %v780 = vor.u32 1.1754944e-38, %v779
        %v781 = vsel %vm778, %v780, %v776
        %v782 = vmul.f32 %v764, %v781
        %783 = vrot.lane.b32.xlu0 %v498, 104
        %v784 = vpop.permute.xlu0 %783
        %v787 = vsel %vm500, %v782, 0
        %789 = vmatpush.msra.mxu0 0.0
        %790 = vmatpush.msra.mxu0 0.0
        %791 = vmatpush.msra.mxu0 0.0
        %792 = vmatpush.msra.mxu0 0.0
        %793 = vmatpush.msra.mxu0 0.0
        %794 = vmatpush.msra.mxu0 0.0
        %795 = vmatpush.msra.mxu0 0.0
        %796 = vmatpush.msra.mxu0 0.0
        %797 = vmatpush.msra.mxu0 0.0
        %798 = vmatpush.msra.mxu0 0.0
        %799 = vmatpush.msra.mxu0 0.0
        %800 = vmatpush.msra.mxu0 0.0
        %801 = vmatpush.msra.mxu0 0.0
        %802 = vmatpush.msra.mxu0 0.0
        %803 = vmatpush.msra.mxu0 0.0
        %804 = vmatpush.msra.mxu0 %v784
        %805 = vmatmul.f32.gmra.mxu0 %v787
        %v806 = vpop.f32.mrf.mxu0
        %v807 = vadd.f32 0.0, %v806
        %808 = vdwg.mxu0
        %810 = vrot.lane.b32.xlu0 %v651, 8
        %v811 = vpop.permute.xlu0 %810
        %814 = vrot.lane.b32.xlu0 %v729, 16
        %v815 = vpop.permute.xlu0 %814
        %818 = vrot.lane.b32.xlu0 %v807, 24
        %v819 = vpop.permute.xlu0 %818
        %v821 = vsel %vm500, %v572, %v811
        %vm822 = vcmask 130048
        %v823 = vsel %vm822, %v821, %v815
        %vm824 = vcmask 195584
        %v825 = vsel %vm824, %v823, %v819
        %v826 = vadd.f32 %v450, %v825
        %v827 = vld [vmem:[%s368] sm:$0xff]
        %v828 = vld [vmem:[%s368 + $0x8] sm:$0xff]
        %v829 = vld [vmem:[%s368 + $0x10] sm:$0xff]
        %v830 = vld [vmem:[%s368 + $0x18] sm:$0xff]
        %v832 = vsel %vm428, %v826, 0
        %834 = vmatpush.msra.mxu0 0.0
        %835 = vmatpush.msra.mxu0 0.0
        %836 = vmatpush.msra.mxu0 0.0
        %837 = vmatpush.msra.mxu0 0.0
        %838 = vmatpush.msra.mxu0 0.0
        %839 = vmatpush.msra.mxu0 0.0
        %840 = vmatpush.msra.mxu0 0.0
        %841 = vmatpush.msra.mxu0 0.0
        %842 = vmatpush.msra.mxu0 0.0
        %843 = vmatpush.msra.mxu0 0.0
        %844 = vmatpush.msra.mxu0 0.0
        %845 = vmatpush.msra.mxu0 0.0
        %846 = vmatpush.msra.mxu0 %v830
        %847 = vmatpush.msra.mxu0 %v829
        %848 = vmatpush.msra.mxu0 %v828
        %849 = vmatpush.msra.mxu0 %v827
        %850 = vmatmul.f32.gmra.mxu0 %v832
        %v851 = vpop.f32.mrf.mxu0
        %v852 = vadd.f32 0.0, %v851
        %853 = vdwg.mxu0
        %v854 = vmax.f32 %v852, 0.0
        %v855 = vadd.f32 %v826, %v854
        %856 = vst.msk [vmem:[#allocation2] sm:$0xff] %vm428, %v855
        %p857 = scmp.eq.s32.totalorder %s33, 1
        // Predicated region
        $region65: #{tpu_custom_call.1} parent=39 // pred_check
          %p858 = pneg %p857
        $region66: #{tpu_custom_call.1} parent=39 // pred_check_branch
          %860 = sbr.rel (%p858) target = $region68
        $region67: #{tpu_custom_call.1} parent=39 // pred_region
          %861 = vst.msk [vmem:[%s415] sm:$0xff] %vm428, %v855
        $region68: #{tpu_custom_call.1} parent=39 // pred_fallthru
          _
        %s862 = sand.u32 %s178, 1
        %s863 = scalar_lea.sflag [#allocation5], %s862
        %s864 = sand.u32 %s178, 1
        %s865 = smul.addr %s864, 8
        %s866 = scalar_lea.vmem [#allocation12], %s865
        // Predicated region
        $region69: #{tpu_custom_call.1} parent=39 // pred_check
          %p867 = pneg %p188
        $region70: #{tpu_custom_call.1} parent=39 // pred_check_branch
          %869 = sbr.rel (%p867) target = $region72
        $region71: #{tpu_custom_call.1} parent=39 // pred_region
          %871 = vsyncadd %s863, 0
          %s872 = smul.addr %s32, 8
          %s873 = scalar_lea.hbm %s5, %s872
          %s875 = sshll.u32 %s866, 4
          %s876 = int_to_ptr.vmem [resolvable:$true] %s875
          %s877 = sshll.u32 %s873, 4
          %s878 = int_to_ptr.hbm [resolvable:$true] %s877
          %880 = dma.vmem_to_hbm [thread:$0]  %s876, 128, %s878, %s863
        $region72: #{tpu_custom_call.1} parent=39 // pred_fallthru
          _
      $region40: #{tpu_custom_call.1} parent=5 // pred_fallthru
        _
      %p881 = scmp.le.s32.totalorder 2, %s23
      // Predicated region
      $region73: #{tpu_custom_call.1} parent=5 // pred_check
        %p882 = pneg %p881
      $region74: #{tpu_custom_call.1} parent=5 // pred_check_branch
        %884 = sbr.rel (%p882) target = $region76
      $region75: #{tpu_custom_call.1} parent=5 // pred_region
        %s885 = ssub.s32 %s23, 2
        // Predicated region
        $region77: #{tpu_custom_call.1} parent=75 // pred_check
          %p886 = pneg %p194
        $region78: #{tpu_custom_call.1} parent=75 // pred_check_branch
          %888 = sbr.rel (%p886) target = $region80
        $region79: #{tpu_custom_call.1} parent=75 // pred_region
          %s889 = sand.u32 %s179, 1
          %s890 = scalar_lea.sflag [#allocation5], %s889
          %s891 = sand.u32 %s179, 1
          %s892 = smul.addr %s891, 8
          %s893 = scalar_lea.vmem [#allocation12], %s892
          %895 = dma.done %s890, 128
        $region80: #{tpu_custom_call.1} parent=75 // pred_fallthru
          _
      $region76: #{tpu_custom_call.1} parent=5 // pred_fallthru
        _
    $region6: #{tpu_custom_call.1} parent=1 // loop_footer
      %s27 = sadd.s32 1, %s23
    $region7: #{tpu_custom_call.1} parent=1 // loop_footer_branch
      %22 = sbr.rel target = $region3
    $region8: #{tpu_custom_call.1} parent=1 // loop_exit
      _
    %896 = vsyncpa [#allocation4], 1
    %s897 = scalar_lea.sflag [#allocation4], 1
    %898 = vsyncpa %s897, 1
    %899 = vsyncpa [#allocation7], 1
    %s900 = scalar_lea.sflag [#allocation7], 1
    %901 = vsyncpa %s900, 1
    %902 = vsyncpa [#allocation10], 1
    %s903 = scalar_lea.sflag [#allocation10], 1
    %904 = vsyncpa %s903, 1
    %905 = vsyncpa [#allocation5], 1
    %s906 = scalar_lea.sflag [#allocation5], 1
    %907 = vsyncpa %s906, 1

</llo_original>
